<compile_context>
chip_gen: v7x
topology: tpu7x:2x2x1
jax: 0.10.0
libtpu: 0.0.40
codegen_flags: <defaults>
</compile_context>

<pallas_src>
import functools

import numpy as np
import jax
import jax.numpy as jnp
from jax.experimental import pallas as pl
from jax.experimental.pallas import tpu as pltpu


# ----------------------------------------------------------------------------
# Kernel 1: scores = features @ table_t      (table pre-transposed to [F, K_pad])
# ----------------------------------------------------------------------------
def _score_kernel(feat_ref, tab_ref, out_ref):
    # feat_ref: (N, F)   tab_ref: (F, TK)   out_ref: (N, TK)
    out_ref[...] = jnp.dot(feat_ref[...], tab_ref[...],
                           preferred_element_type=jnp.float32)


# ----------------------------------------------------------------------------
# Kernel 2: pos_feats_pad[i] = lookup_table[idx[i]]   (scalar-prefetch row gather)
# Only the N indexed rows are DMA'd from HBM (not the whole table).
# ----------------------------------------------------------------------------
def _gather_kernel(idx_ref, row_ref, out_ref):
    del idx_ref  # consumed by the index_maps
    out_ref[...] = row_ref[...]


def _pick_tile_k(K, tile_k):
    """Lane-dense persons tile; keep >=2 grid steps when possible (v7x megacore)."""
    K128 = ((K + 127) // 128) * 128
    tk = max(128, min(int(tile_k), K128))
    tk = (tk // 128) * 128
    if K128 // tk < 2 and K128 >= 256:
        tk = max(128, ((K128 // 2) // 128) * 128)
    return tk


@functools.partial(jax.jit, static_argnames=("tile_k",))
def _labeled_matching_device(features, pid_labels, lookup_table, tile_k=512):
    N, F = features.shape
    K, F2 = lookup_table.shape
    assert F == F2

    tk = _pick_tile_k(K, tile_k)
    K_pad = ((K + tk - 1) // tk) * tk

    # ---------------- hot path: [N,F] @ [F,K_pad] on the MXU ----------------
    # One-time layout plumbing: transpose + pad the persons axis so every output
    # store is an unmasked, lane-dense multiple of 128.
    table_t = jnp.pad(lookup_table.T, ((0, 0), (0, K_pad - K)))

    scores_pad = pl.pallas_call(
        _score_kernel,
        out_shape=jax.ShapeDtypeStruct((N, K_pad), jnp.float32),
        grid=(K_pad // tk,),
        in_specs=[
            # constant block index -> features fetched once, stay resident
            pl.BlockSpec((N, F), lambda j: (0, 0)),
            pl.BlockSpec((F, tk), lambda j: (0, j)),
        ],
        out_specs=pl.BlockSpec((N, tk), lambda j: (0, j)),
        compiler_params=pltpu.CompilerParams(
            dimension_semantics=("parallel",)),
    )(features, table_t)
    scores = scores_pad[:, :K]

    # ------------- on-device compaction of positive labels ------------------
    labels = pid_labels.astype(jnp.int32)
    mask = labels > 0
    n_pos = jnp.sum(mask.astype(jnp.int32))
    slot = jnp.cumsum(mask.astype(jnp.int32)) - 1        # packed destination slot
    scatter_to = jnp.where(mask, slot, N)                # N -> dropped
    pos_pids_pad = jnp.zeros((N,), jnp.int32).at[scatter_to].set(labels, mode="drop")
    gather_idx = jnp.clip(pos_pids_pad, 0, K - 1)        # bounds-safe row indices

    # ------------- row gather: DMA only the indexed table rows --------------
    # View table as [K, 1, F] so the block's last two dims equal the array dims.
    table_3d = lookup_table.reshape(K, 1, F)
    pos_feats_pad = pl.pallas_call(
        _gather_kernel,
        out_shape=jax.ShapeDtypeStruct((N, 1, F), lookup_table.dtype),
        grid_spec=pltpu.PrefetchScalarGridSpec(
            num_scalar_prefetch=1,
            grid=(N,),
            in_specs=[pl.BlockSpec((1, 1, F), lambda i, idx: (idx[i], 0, 0))],
            out_specs=pl.BlockSpec((1, 1, F), lambda i, idx: (i, 0, 0)),
        ),
    )(gather_idx, table_3d)
    pos_feats_pad = pos_feats_pad.reshape(N, F)

    return scores, pos_feats_pad, pos_pids_pad, n_pos


def labeled_matching_q(features, pid_labels, lookup_table, *, tile_k=512):
    scores, pos_feats_pad, pos_pids_pad, n_pos = _labeled_matching_device(
        features, pid_labels, lookup_table, tile_k=tile_k)
    # TODO(synk): dynamic-length outputs (pid_labels > 0 compaction) have no
    # static-shape equivalent; a single scalar sync slices the padded results.
    n = int(n_pos)
    return scores, pos_feats_pad[:n], pos_pids_pad[:n]


# ----------------------------------------------------------------------------
# Module-equivalent container
# ----------------------------------------------------------------------------
class LabeledMatchingLayerQ:
    def __init__(self, num_persons=5532, feat_len=256, key=None):
        # PyTorch __init__ registers a zeros buffer; for a non-trivial numeric
        # test we fill it deterministically from a PRNG key instead.
        if key is None:
            self.lookup_table = jnp.zeros((num_persons, feat_len), jnp.float32)
        else:
            self.lookup_table = jax.random.normal(
                key, (num_persons, feat_len), jnp.float32) * 0.02

    def __call__(self, features, pid_labels):
        return labeled_matching_q(features, pid_labels, self.lookup_table)


if __name__ == "__main__":
    key = jax.random.PRNGKey(0)
    k_feat, k_tab, k_lab = jax.random.split(key, 3)

    N = 16             # number of proposals
    feat_len = 256     # feature length (matches module default)
    num_persons = 300  # deliberately NOT a multiple of 128 -> exercises padding path

    features = jax.random.normal(k_feat, (N, feat_len), jnp.float32)
    # labels in [-1, num_persons): -1/0 = unlabeled/background, >0 = labeled person id
    pid_labels = jax.random.randint(k_lab, (N,), -1, num_persons, dtype=jnp.int32)

    layer = LabeledMatchingLayerQ(num_persons, feat_len, key=k_tab)
    scores, pos_feats, pos_pids = layer(features, pid_labels)
    jax.block_until_ready((scores, pos_feats, pos_pids))

    # reference check (plain JAX / numpy)
    scores_ref = features @ layer.lookup_table.T
    labels_np = np.asarray(pid_labels)
    pos_pids_ref = labels_np[labels_np > 0].astype(np.int32)
    pos_feats_ref = np.asarray(layer.lookup_table)[pos_pids_ref]

    np.testing.assert_allclose(np.asarray(scores), np.asarray(scores_ref),
                               rtol=1e-4, atol=1e-4)
    np.testing.assert_array_equal(np.asarray(pos_pids), pos_pids_ref)
    np.testing.assert_allclose(np.asarray(pos_feats), pos_feats_ref,
                               rtol=1e-6, atol=1e-6)

    print("KERNEL_OK")
</pallas_src>

<mosaic_0001>
module attributes {stable_mosaic.version = 11 : i64} {
  func.func @_score_kernel(%arg0: i32, %arg1: memref<16x256xf32, #tpu.memory_space<vmem>>, %arg2: memref<256x128xf32, #tpu.memory_space<vmem>>, %arg3: memref<16x128xf32, #tpu.memory_space<vmem>>) attributes {dimension_semantics = [#tpu.dimension_semantics<parallel>], iteration_bounds = array<i64: 3>, scalar_prefetch = 0 : i64, scratch_operands = 0 : i64, tpu.core_type = #tpu.core_type<tc>, window_params = [{pipeline_mode = #tpu.pipeline_mode<synchronous>, transform_indices = @transform_0, window_bounds = array<i64: 16, 256>}, {transform_indices = @transform_1, window_bounds = array<i64: 256, 128>}, {transform_indices = @transform_2, window_bounds = array<i64: 16, 128>}]} {
    %c0 = arith.constant 0 : index
    %c0_0 = arith.constant 0 : index
    %0 = vector.load %arg1[%c0, %c0_0] : memref<16x256xf32, #tpu.memory_space<vmem>>, vector<16x256xf32>
    %c0_1 = arith.constant 0 : index
    %c0_2 = arith.constant 0 : index
    %1 = vector.load %arg2[%c0_1, %c0_2] : memref<256x128xf32, #tpu.memory_space<vmem>>, vector<256x128xf32>
    %cst = arith.constant dense<0.000000e+00> : vector<16x128xf32>
    %2 = tpu.matmul %0, %1, %cst {dimension_numbers = #tpu.dot_dimension_numbers<[1], [0], [0], [1], [0, 0, 1, 1], [], []>} : vector<16x256xf32>, vector<256x128xf32>, vector<16x128xf32> -> vector<16x128xf32>
    %c0_3 = arith.constant 0 : index
    %c0_4 = arith.constant 0 : index
    %3 = vector.load %arg3[%c0_3, %c0_4] : memref<16x128xf32, #tpu.memory_space<vmem>>, vector<16x128xf32>
    tpu.vector_store %arg3[%c0_3, %c0_4], %2 {strides = array<i32>} : memref<16x128xf32, #tpu.memory_space<vmem>>, vector<16x128xf32>,
    return
  }
  func.func @transform_0(%arg0: i32) -> (i32, i32) {
    %c0_i32 = arith.constant 0 : i32
    %c0_i32_0 = arith.constant 0 : i32
    %c0_i32_1 = arith.constant 0 : i32
    return %c0_i32, %c0_i32_0 : i32, i32
  }
  func.func @transform_1(%arg0: i32) -> (i32, i32) {
    %c0_i32 = arith.constant 0 : i32
    %c0_i32_0 = arith.constant 0 : i32
    return %c0_i32, %arg0 : i32, i32
  }
  func.func @transform_2(%arg0: i32) -> (i32, i32) {
    %c0_i32 = arith.constant 0 : i32
    %c0_i32_0 = arith.constant 0 : i32
    return %c0_i32, %arg0 : i32, i32
  }
}

module attributes {stable_mosaic.version = 11 : i64} {
  func.func @_gather_kernel(%arg0: i32, %arg1: memref<16xi32, #tpu.memory_space<smem>>, %arg2: memref<1x1x256xf32, #tpu.memory_space<vmem>>, %arg3: memref<1x1x256xf32, #tpu.memory_space<vmem>>) attributes {dimension_semantics = [#tpu.dimension_semantics<arbitrary>], iteration_bounds = array<i64: 16>, scalar_prefetch = 1 : i64, scratch_operands = 0 : i64, tpu.core_type = #tpu.core_type<tc>, window_params = [{transform_indices = @transform_0, window_bounds = array<i64: 1, 1, 256>}, {transform_indices = @transform_1, window_bounds = array<i64: 1, 1, 256>}]} {
    %c0 = arith.constant 0 : index
    %c0_0 = arith.constant 0 : index
    %c0_1 = arith.constant 0 : index
    %0 = vector.load %arg2[%c0, %c0_0, %c0_1] : memref<1x1x256xf32, #tpu.memory_space<vmem>>, vector<1x1x256xf32>
    %c0_2 = arith.constant 0 : index
    %c0_3 = arith.constant 0 : index
    %c0_4 = arith.constant 0 : index
    %1 = vector.load %arg3[%c0_2, %c0_3, %c0_4] : memref<1x1x256xf32, #tpu.memory_space<vmem>>, vector<1x1x256xf32>
    tpu.vector_store %arg3[%c0_2, %c0_3, %c0_4], %0 {strides = array<i32>} : memref<1x1x256xf32, #tpu.memory_space<vmem>>, vector<1x1x256xf32>,
    return
  }
  func.func @transform_0(%arg0: i32, %arg1: memref<16xi32, #tpu.memory_space<smem>>) -> (i32, i32, i32) {
    %0 = arith.index_cast %arg0 : i32 to index
    %1 = memref.load %arg1[%0] : memref<16xi32, #tpu.memory_space<smem>>
    %c0_i32 = arith.constant 0 : i32
    %c0_i32_0 = arith.constant 0 : i32
    %c0_i32_1 = arith.constant 0 : i32
    return %1, %c0_i32, %c0_i32_0 : i32, i32, i32
  }
  func.func @transform_1(%arg0: i32, %arg1: memref<16xi32, #tpu.memory_space<smem>>) -> (i32, i32, i32) {
    %c0_i32 = arith.constant 0 : i32
    %c0_i32_0 = arith.constant 0 : i32
    %c0_i32_1 = arith.constant 0 : i32
    return %arg0, %c0_i32, %c0_i32_0 : i32, i32, i32
  }
}

</mosaic_0001>

<llo_original>
// kernel: _labeled_matching_device.2
$region0: #{_labeled_matching_device.2}
  #allocation0 [shape = 'u32[]', space=smem, size = 0x4, offset = 0x4, fixed_abs, tag = 'smem constant byte address 0x4 - core index']
  #allocation1 [shape = 'u32[144,128]{1,0:T(1,128)}', space=vmem, size = 0x12000, scoped, tag = 'internal scratch']
  %s0 = inlined_call_operand.vmem [shape: f32[16,256], index: 0, kind: input, shape index: {}]
  %s1 = inlined_call_operand.vmem [shape: f32[256,384], index: 1, kind: input, shape index: {}]
  %s2 = inlined_call_operand.hbm [shape: f32[16,384], index: 2, kind: output, shape index: {}]
  %s3 = sld [smem:[#allocation0]]
  $region79: #{_labeled_matching_device.2} parent=0
    _
  %s5 = ssub.s32 1, %s3
  %s6 = scalar_select 0, %s5, %s3
  $region1: #{_labeled_matching_device.2} parent=0
    #allocation2 [shape = 'u8[262144]{0}', space=vmem, size = 0x40000, scoped, tag = 'input window, operand 1']
    #allocation3 [shape = 'u8[16384]{0}', space=vmem, size = 0x4000, scoped, tag = 'output window, operand 0']
    #allocation4 [shape = 's32[2]{0}', space=sflag, size = 0x8, scoped, tag = 'scoped memory for _labeled_matching_device.2']
    %7 = vsyncpa [#allocation4], 0
    %s8 = scalar_lea.sflag [#allocation4], 1
    %9 = vsyncpa %s8, 0
    loop: start=0, step=1, limit=5
    $region2: #{_labeled_matching_device.2} parent=1 // loop_pre_header
      _
    $region3: #{_labeled_matching_device.2} parent=1 // loop_header
      %s11 = sphi 0, %s15
      %p12 = scmp.ge.s32.totalorder %s11, 5
      %s19 = sphi 0, %s19
      %s21 = sphi 0, %s19
      %s22 = sphi 0, %s21
      %s36 = sphi 0, %s22
      %s42 = sphi 0, %s44
      %s45 = sphi 0, %s42
      %s46 = sphi 0, %s45
      %s62 = sphi 0, %s46
      %s68 = sphi 0, %s70
      %s71 = sphi 0, %s68
      %s72 = sphi 0, %s71
      %s88 = sphi 0, %s72
    $region4: #{_labeled_matching_device.2} parent=1 // loop_header_branch
      %14 = sbr.rel (%p12) target = $region8
    $region5: #{_labeled_matching_device.2} parent=1 // loop_body
      %s16 = ssub.s32 %s11, 1
      %s17 = ssub.s32 %s11, 2
      %s18 = sadd.s32 %s11, 1
      %s20 = sadd.s32 %s19, 1
      %p23 = scmp.eq.s32.totalorder %s11, 2
      %p24 = scmp.ne.s32.totalorder %s19, %s21
      %p25 = scmp.eq.s32.totalorder %s11, 0
      %p26 = por %p24, %p25
      %p27 = scmp.ne.s32.totalorder %s19, %s21
      %p28 = scmp.eq.s32.totalorder %s16, 2
      %p29 = por %p27, %p28
      %p30 = scmp.ne.s32.totalorder %s21, %s22
      %p31 = scmp.eq.s32.totalorder %s16, 0
      %p32 = por %p30, %p31
      %p33 = scmp.ne.s32.totalorder %s21, %s22
      %p34 = scmp.eq.s32.totalorder %s17, 2
      %p35 = por %p33, %p34
      %p37 = scmp.ne.s32.totalorder %s22, %s36
      %p38 = scmp.eq.s32.totalorder %s17, 0
      %p39 = por %p37, %p38
      %s40 = ssub.s32 %s11, %s18
      %p41 = scmp.eq.s32.totalorder %s40, 0
      %s43 = sadd.s32 %s42, 1
      %s44 = scalar_select %p41, %s42, %s43
      %p47 = pneg %p41
      %p48 = scmp.eq.s32.totalorder %s11, 2
      %p49 = por %p47, %p48
      %p50 = scmp.ne.s32.totalorder %s42, %s45
      %p51 = scmp.eq.s32.totalorder %s11, 0
      %p52 = por %p50, %p51
      %p53 = scmp.ne.s32.totalorder %s42, %s45
      %p54 = scmp.eq.s32.totalorder %s16, 2
      %p55 = por %p53, %p54
      %p56 = scmp.ne.s32.totalorder %s45, %s46
      %p57 = scmp.eq.s32.totalorder %s16, 0
      %p58 = por %p56, %p57
      %p59 = scmp.ne.s32.totalorder %s45, %s46
      %p60 = scmp.eq.s32.totalorder %s17, 2
      %p61 = por %p59, %p60
      %p63 = scmp.ne.s32.totalorder %s46, %s62
      %p64 = scmp.eq.s32.totalorder %s17, 0
      %p65 = por %p63, %p64
      %s66 = ssub.s32 %s11, %s18
      %p67 = scmp.eq.s32.totalorder %s66, 0
      %s69 = sadd.s32 %s68, 1
      %s70 = scalar_select %p67, %s68, %s69
      %p73 = pneg %p67
      %p74 = scmp.eq.s32.totalorder %s11, 2
      %p75 = por %p73, %p74
      %p76 = scmp.ne.s32.totalorder %s68, %s71
      %p77 = scmp.eq.s32.totalorder %s11, 0
      %p78 = por %p76, %p77
      %p79 = scmp.ne.s32.totalorder %s68, %s71
      %p80 = scmp.eq.s32.totalorder %s16, 2
      %p81 = por %p79, %p80
      %p82 = scmp.ne.s32.totalorder %s71, %s72
      %p83 = scmp.eq.s32.totalorder %s16, 0
      %p84 = por %p82, %p83
      %p85 = scmp.ne.s32.totalorder %s71, %s72
      %p86 = scmp.eq.s32.totalorder %s17, 2
      %p87 = por %p85, %p86
      %p89 = scmp.ne.s32.totalorder %s72, %s88
      %p90 = scmp.eq.s32.totalorder %s17, 0
      %p91 = por %p89, %p90
      %p92 = scmp.le.s32.totalorder 1, %s11
      %p93 = scmp.lt.s32.totalorder %s11, 4
      %p94 = pnand %p92, %p93
      %p95 = pneg %p94
      // Predicated region
      $region9: #{_labeled_matching_device.2} parent=5 // pred_check
        _
      $region10: #{_labeled_matching_device.2} parent=5 // pred_check_branch
        %97 = sbr.rel (%p94) target = $region12
      $region11: #{_labeled_matching_device.2} parent=5 // pred_region
        %s98 = ssub.s32 %s11, 1
        // Predicated region
        $region13: #{_labeled_matching_device.2} parent=11 // pred_check
          %p99 = pneg %p32
        $region14: #{_labeled_matching_device.2} parent=11 // pred_check_branch
          %101 = sbr.rel (%p99) target = $region16
        $region15: #{_labeled_matching_device.2} parent=11 // pred_region
          _
        $region16: #{_labeled_matching_device.2} parent=11 // pred_fallthru
          _
      $region12: #{_labeled_matching_device.2} parent=5 // pred_fallthru
        _
      %p102 = scmp.lt.s32.totalorder %s11, 3
      // Predicated region
      $region17: #{_labeled_matching_device.2} parent=5 // pred_check
        %p103 = pneg %p102
      $region18: #{_labeled_matching_device.2} parent=5 // pred_check_branch
        %105 = sbr.rel (%p103) target = $region20
      $region19: #{_labeled_matching_device.2} parent=5 // pred_region
        // Predicated region
        $region21: #{_labeled_matching_device.2} parent=19 // pred_check
          %p106 = pneg %p52
        $region22: #{_labeled_matching_device.2} parent=19 // pred_check_branch
          %108 = sbr.rel (%p106) target = $region24
        $region23: #{_labeled_matching_device.2} parent=19 // pred_region
          %s109 = sand.u32 %s42, 1
          %s110 = sand.u32 %s42, 1
          %s111 = smul.addr %s110, 256
          %s112 = scalar_lea.vmem [#allocation2], %s111
          %s113 = smul.addr %s11, 8
          %s114 = scalar_lea.vmem %s1, %s113
          // Predicated region
          $region25: #{_labeled_matching_device.2} parent=23 // pred_check
            _
          $region26: #{_labeled_matching_device.2} parent=23 // pred_check_branch
            %116 = sbr.rel (0) target = $region28
          $region27: #{_labeled_matching_device.2} parent=23 // pred_region
            // Predicated region
            $region29: #{_labeled_matching_device.2} parent=27 // pred_check
              _
            $region30: #{_labeled_matching_device.2} parent=27 // pred_check_branch
              %118 = sbr.rel (0) target = $region32
            $region31: #{_labeled_matching_device.2} parent=27 // pred_region
              // Predicated region
              $region44: #{_labeled_matching_device.2} parent=31 // pred_check
                _
              $region45: #{_labeled_matching_device.2} parent=31 // pred_check_branch
                %195 = sbr.rel (0) target = $region47
              $region46: #{_labeled_matching_device.2} parent=31 // pred_region
                loop: start=0, step=1, limit=1
                $region48: #{_labeled_matching_device.2} parent=46 // loop_pre_header
                  _
                $region49: #{_labeled_matching_device.2} parent=46 // loop_header
                  %s197 = sphi 0, %s201
                  %p198 = scmp.ge.s32.totalorder %s197, 1
                  %s202 = sphi %s114, %s114
                  %s203 = sphi %s112, %s112
                $region50: #{_labeled_matching_device.2} parent=46 // loop_header_branch
                  %200 = sbr.rel (%p198) target = $region54
                $region51: #{_labeled_matching_device.2} parent=46 // loop_body
                  %v204 = vld [vmem:[%s202] sm:$0xff]
                  %205 = vst [vmem:[%s203] sm:$0xff] %v204
                  %v206 = vld [vmem:[%s202 + $0x18] sm:$0xff]
                  %207 = vst [vmem:[%s203 + $0x8] sm:$0xff] %v206
                  %v208 = vld [vmem:[%s202 + $0x30] sm:$0xff]
                  %209 = vst [vmem:[%s203 + $0x10] sm:$0xff] %v208
                  %v210 = vld [vmem:[%s202 + $0x48] sm:$0xff]
                  %211 = vst [vmem:[%s203 + $0x18] sm:$0xff] %v210
                  %v212 = vld [vmem:[%s202 + $0x60] sm:$0xff]
                  %213 = vst [vmem:[%s203 + $0x20] sm:$0xff] %v212
                  %v214 = vld [vmem:[%s202 + $0x78] sm:$0xff]
                  %215 = vst [vmem:[%s203 + $0x28] sm:$0xff] %v214
                  %v216 = vld [vmem:[%s202 + $0x90] sm:$0xff]
                  %217 = vst [vmem:[%s203 + $0x30] sm:$0xff] %v216
                  %v218 = vld [vmem:[%s202 + $0xa8] sm:$0xff]
                  %219 = vst [vmem:[%s203 + $0x38] sm:$0xff] %v218
                  %v220 = vld [vmem:[%s202 + $0xc0] sm:$0xff]
                  %221 = vst [vmem:[%s203 + $0x40] sm:$0xff] %v220
                  %v222 = vld [vmem:[%s202 + $0xd8] sm:$0xff]
                  %223 = vst [vmem:[%s203 + $0x48] sm:$0xff] %v222
                  %v224 = vld [vmem:[%s202 + $0xf0] sm:$0xff]
                  %225 = vst [vmem:[%s203 + $0x50] sm:$0xff] %v224
                  %v226 = vld [vmem:[%s202 + $0x108] sm:$0xff]
                  %227 = vst [vmem:[%s203 + $0x58] sm:$0xff] %v226
                  %v228 = vld [vmem:[%s202 + $0x120] sm:$0xff]
                  %229 = vst [vmem:[%s203 + $0x60] sm:$0xff] %v228
                  %v230 = vld [vmem:[%s202 + $0x138] sm:$0xff]
                  %231 = vst [vmem:[%s203 + $0x68] sm:$0xff] %v230
                  %v232 = vld [vmem:[%s202 + $0x150] sm:$0xff]
                  %233 = vst [vmem:[%s203 + $0x70] sm:$0xff] %v232
                  %v234 = vld [vmem:[%s202 + $0x168] sm:$0xff]
                  %235 = vst [vmem:[%s203 + $0x78] sm:$0xff] %v234
                  %v236 = vld [vmem:[%s202 + $0x180] sm:$0xff]
                  %237 = vst [vmem:[%s203 + $0x80] sm:$0xff] %v236
                  %v238 = vld [vmem:[%s202 + $0x198] sm:$0xff]
                  %239 = vst [vmem:[%s203 + $0x88] sm:$0xff] %v238
                  %v240 = vld [vmem:[%s202 + $0x1b0] sm:$0xff]
                  %241 = vst [vmem:[%s203 + $0x90] sm:$0xff] %v240
                  %v242 = vld [vmem:[%s202 + $0x1c8] sm:$0xff]
                  %243 = vst [vmem:[%s203 + $0x98] sm:$0xff] %v242
                  %v244 = vld [vmem:[%s202 + $0x1e0] sm:$0xff]
                  %245 = vst [vmem:[%s203 + $0xa0] sm:$0xff] %v244
                  %v246 = vld [vmem:[%s202 + $0x1f8] sm:$0xff]
                  %247 = vst [vmem:[%s203 + $0xa8] sm:$0xff] %v246
                  %v248 = vld [vmem:[%s202 + $0x210] sm:$0xff]
                  %249 = vst [vmem:[%s203 + $0xb0] sm:$0xff] %v248
                  %v250 = vld [vmem:[%s202 + $0x228] sm:$0xff]
                  %251 = vst [vmem:[%s203 + $0xb8] sm:$0xff] %v250
                  %v252 = vld [vmem:[%s202 + $0x240] sm:$0xff]
                  %253 = vst [vmem:[%s203 + $0xc0] sm:$0xff] %v252
                  %v254 = vld [vmem:[%s202 + $0x258] sm:$0xff]
                  %255 = vst [vmem:[%s203 + $0xc8] sm:$0xff] %v254
                  %v256 = vld [vmem:[%s202 + $0x270] sm:$0xff]
                  %257 = vst [vmem:[%s203 + $0xd0] sm:$0xff] %v256
                  %v258 = vld [vmem:[%s202 + $0x288] sm:$0xff]
                  %259 = vst [vmem:[%s203 + $0xd8] sm:$0xff] %v258
                  %v260 = vld [vmem:[%s202 + $0x2a0] sm:$0xff]
                  %261 = vst [vmem:[%s203 + $0xe0] sm:$0xff] %v260
                  %v262 = vld [vmem:[%s202 + $0x2b8] sm:$0xff]
                  %263 = vst [vmem:[%s203 + $0xe8] sm:$0xff] %v262
                  %v264 = vld [vmem:[%s202 + $0x2d0] sm:$0xff]
                  %265 = vst [vmem:[%s203 + $0xf0] sm:$0xff] %v264
                  %v266 = vld [vmem:[%s202 + $0x2e8] sm:$0xff]
                  %267 = vst [vmem:[%s203 + $0xf8] sm:$0xff] %v266
                $region52: #{_labeled_matching_device.2} parent=46 // loop_footer
                  %s201 = sadd.s32 1, %s197
                $region53: #{_labeled_matching_device.2} parent=46 // loop_footer_branch
                  %196 = sbr.rel target = $region49
                $region54: #{_labeled_matching_device.2} parent=46 // loop_exit
                  _
              $region47: #{_labeled_matching_device.2} parent=31 // pred_fallthru
                _
              // Predicated region
              $region55: #{_labeled_matching_device.2} parent=31 // pred_check
                _
              $region56: #{_labeled_matching_device.2} parent=31 // pred_check_branch
                %269 = sbr.rel target = $region58
              $region57: #{_labeled_matching_device.2} parent=31 // pred_region
                _
              $region58: #{_labeled_matching_device.2} parent=31 // pred_fallthru
                _
            $region32: #{_labeled_matching_device.2} parent=27 // pred_fallthru
              _
            // Predicated region
            $region33: #{_labeled_matching_device.2} parent=27 // pred_check
              _
            $region34: #{_labeled_matching_device.2} parent=27 // pred_check_branch
              %120 = sbr.rel target = $region36
            $region35: #{_labeled_matching_device.2} parent=27 // pred_region
              loop: start=0, step=1, limit=1
              $region37: #{_labeled_matching_device.2} parent=35 // loop_pre_header
                _
              $region38: #{_labeled_matching_device.2} parent=35 // loop_header
                %s123 = sphi 0, %s127
                %p124 = scmp.ge.s32.totalorder %s123, 1
                %s128 = sphi %s114, %s114
                %s129 = sphi %s112, %s112
              $region39: #{_labeled_matching_device.2} parent=35 // loop_header_branch
                %126 = sbr.rel (%p124) target = $region43
              $region40: #{_labeled_matching_device.2} parent=35 // loop_body
                %v130 = vld [vmem:[%s128] sm:$0xff]
                %131 = vst [vmem:[%s129] sm:$0xff] %v130
                %v132 = vld [vmem:[%s128 + $0x18] sm:$0xff]
                %133 = vst [vmem:[%s129 + $0x8] sm:$0xff] %v132
                %v134 = vld [vmem:[%s128 + $0x30] sm:$0xff]
                %135 = vst [vmem:[%s129 + $0x10] sm:$0xff] %v134
                %v136 = vld [vmem:[%s128 + $0x48] sm:$0xff]
                %137 = vst [vmem:[%s129 + $0x18] sm:$0xff] %v136
                %v138 = vld [vmem:[%s128 + $0x60] sm:$0xff]
                %139 = vst [vmem:[%s129 + $0x20] sm:$0xff] %v138
                %v140 = vld [vmem:[%s128 + $0x78] sm:$0xff]
                %141 = vst [vmem:[%s129 + $0x28] sm:$0xff] %v140
                %v142 = vld [vmem:[%s128 + $0x90] sm:$0xff]
                %143 = vst [vmem:[%s129 + $0x30] sm:$0xff] %v142
                %v144 = vld [vmem:[%s128 + $0xa8] sm:$0xff]
                %145 = vst [vmem:[%s129 + $0x38] sm:$0xff] %v144
                %v146 = vld [vmem:[%s128 + $0xc0] sm:$0xff]
                %147 = vst [vmem:[%s129 + $0x40] sm:$0xff] %v146
                %v148 = vld [vmem:[%s128 + $0xd8] sm:$0xff]
                %149 = vst [vmem:[%s129 + $0x48] sm:$0xff] %v148
                %v150 = vld [vmem:[%s128 + $0xf0] sm:$0xff]
                %151 = vst [vmem:[%s129 + $0x50] sm:$0xff] %v150
                %v152 = vld [vmem:[%s128 + $0x108] sm:$0xff]
                %153 = vst [vmem:[%s129 + $0x58] sm:$0xff] %v152
                %v154 = vld [vmem:[%s128 + $0x120] sm:$0xff]
                %155 = vst [vmem:[%s129 + $0x60] sm:$0xff] %v154
                %v156 = vld [vmem:[%s128 + $0x138] sm:$0xff]
                %157 = vst [vmem:[%s129 + $0x68] sm:$0xff] %v156
                %v158 = vld [vmem:[%s128 + $0x150] sm:$0xff]
                %159 = vst [vmem:[%s129 + $0x70] sm:$0xff] %v158
                %v160 = vld [vmem:[%s128 + $0x168] sm:$0xff]
                %161 = vst [vmem:[%s129 + $0x78] sm:$0xff] %v160
                %v162 = vld [vmem:[%s128 + $0x180] sm:$0xff]
                %163 = vst [vmem:[%s129 + $0x80] sm:$0xff] %v162
                %v164 = vld [vmem:[%s128 + $0x198] sm:$0xff]
                %165 = vst [vmem:[%s129 + $0x88] sm:$0xff] %v164
                %v166 = vld [vmem:[%s128 + $0x1b0] sm:$0xff]
                %167 = vst [vmem:[%s129 + $0x90] sm:$0xff] %v166
                %v168 = vld [vmem:[%s128 + $0x1c8] sm:$0xff]
                %169 = vst [vmem:[%s129 + $0x98] sm:$0xff] %v168
                %v170 = vld [vmem:[%s128 + $0x1e0] sm:$0xff]
                %171 = vst [vmem:[%s129 + $0xa0] sm:$0xff] %v170
                %v172 = vld [vmem:[%s128 + $0x1f8] sm:$0xff]
                %173 = vst [vmem:[%s129 + $0xa8] sm:$0xff] %v172
                %v174 = vld [vmem:[%s128 + $0x210] sm:$0xff]
                %175 = vst [vmem:[%s129 + $0xb0] sm:$0xff] %v174
                %v176 = vld [vmem:[%s128 + $0x228] sm:$0xff]
                %177 = vst [vmem:[%s129 + $0xb8] sm:$0xff] %v176
                %v178 = vld [vmem:[%s128 + $0x240] sm:$0xff]
                %179 = vst [vmem:[%s129 + $0xc0] sm:$0xff] %v178
                %v180 = vld [vmem:[%s128 + $0x258] sm:$0xff]
                %181 = vst [vmem:[%s129 + $0xc8] sm:$0xff] %v180
                %v182 = vld [vmem:[%s128 + $0x270] sm:$0xff]
                %183 = vst [vmem:[%s129 + $0xd0] sm:$0xff] %v182
                %v184 = vld [vmem:[%s128 + $0x288] sm:$0xff]
                %185 = vst [vmem:[%s129 + $0xd8] sm:$0xff] %v184
                %v186 = vld [vmem:[%s128 + $0x2a0] sm:$0xff]
                %187 = vst [vmem:[%s129 + $0xe0] sm:$0xff] %v186
                %v188 = vld [vmem:[%s128 + $0x2b8] sm:$0xff]
                %189 = vst [vmem:[%s129 + $0xe8] sm:$0xff] %v188
                %v190 = vld [vmem:[%s128 + $0x2d0] sm:$0xff]
                %191 = vst [vmem:[%s129 + $0xf0] sm:$0xff] %v190
                %v192 = vld [vmem:[%s128 + $0x2e8] sm:$0xff]
                %193 = vst [vmem:[%s129 + $0xf8] sm:$0xff] %v192
              $region41: #{_labeled_matching_device.2} parent=35 // loop_footer
                %s127 = sadd.s32 1, %s123
              $region42: #{_labeled_matching_device.2} parent=35 // loop_footer_branch
                %122 = sbr.rel target = $region38
              $region43: #{_labeled_matching_device.2} parent=35 // loop_exit
                _
            $region36: #{_labeled_matching_device.2} parent=27 // pred_fallthru
              _
          $region28: #{_labeled_matching_device.2} parent=23 // pred_fallthru
            _
          %270 = vnop
        $region24: #{_labeled_matching_device.2} parent=19 // pred_fallthru
          _
      $region20: #{_labeled_matching_device.2} parent=5 // pred_fallthru
        _
      %p271 = scmp.le.s32.totalorder 1, %s11
      %p272 = scmp.lt.s32.totalorder %s11, 4
      %p273 = pnand %p271, %p272
      %p274 = pneg %p273
      // Predicated region
      $region59: #{_labeled_matching_device.2} parent=5 // pred_check
        _
      $region60: #{_labeled_matching_device.2} parent=5 // pred_check_branch
        %276 = sbr.rel (%p273) target = $region62
      $region61: #{_labeled_matching_device.2} parent=5 // pred_region
        %s277 = ssub.s32 %s11, 1
        %s278 = sand.u32 %s45, 1
        %s279 = sand.u32 %s45, 1
        %s280 = smul.addr %s279, 256
        %s281 = scalar_lea.vmem [#allocation2], %s280
        // Predicated region
        $region63: #{_labeled_matching_device.2} parent=61 // pred_check
          %p282 = pneg %p58
        $region64: #{_labeled_matching_device.2} parent=61 // pred_check_branch
          %284 = sbr.rel (%p282) target = $region66
        $region65: #{_labeled_matching_device.2} parent=61 // pred_region
          _
        $region66: #{_labeled_matching_device.2} parent=61 // pred_fallthru
          _
        %p285 = pneg %p32
        %p286 = pneg %p29
        %s287 = sand.u32 %s45, 1
        %s288 = sand.u32 %s45, 1
        %s289 = smul.addr %s288, 256
        %s290 = scalar_lea.vmem [#allocation2], %s289
        %p291 = pneg %p58
        %p292 = pneg %p55
        %p293 = pneg %p84
        %p294 = pneg %p81
        %s295 = sand.u32 %s71, 1
        %s296 = scalar_lea.sflag [#allocation4], %s295
        %s297 = sand.u32 %s71, 1
        %s298 = smul.addr %s297, 16
        %s299 = scalar_lea.vmem [#allocation3], %s298
        %v300 = vld [vmem:[%s0] sm:$0xff]
        %v301 = vld [vmem:[%s0 + $0x8] sm:$0xff]
        %v302 = vld [vmem:[%s0 + $0x10] sm:$0xff]
        %v303 = vld [vmem:[%s0 + $0x18] sm:$0xff]
        %v304 = vld [vmem:[%s281] sm:$0xff]
        %v305 = vld [vmem:[%s281 + $0x8] sm:$0xff]
        %v306 = vld [vmem:[%s281 + $0x10] sm:$0xff]
        %v307 = vld [vmem:[%s281 + $0x18] sm:$0xff]
        %v308 = vld [vmem:[%s281 + $0x20] sm:$0xff]
        %v309 = vld [vmem:[%s281 + $0x28] sm:$0xff]
        %v310 = vld [vmem:[%s281 + $0x30] sm:$0xff]
        %v311 = vld [vmem:[%s281 + $0x38] sm:$0xff]
        %v312 = vld [vmem:[%s281 + $0x40] sm:$0xff]
        %v313 = vld [vmem:[%s281 + $0x48] sm:$0xff]
        %v314 = vld [vmem:[%s281 + $0x50] sm:$0xff]
        %v315 = vld [vmem:[%s281 + $0x58] sm:$0xff]
        %v316 = vld [vmem:[%s281 + $0x60] sm:$0xff]
        %v317 = vld [vmem:[%s281 + $0x68] sm:$0xff]
        %v318 = vld [vmem:[%s281 + $0x70] sm:$0xff]
        %v319 = vld [vmem:[%s281 + $0x78] sm:$0xff]
        %v320 = vld [vmem:[%s281 + $0x80] sm:$0xff]
        %v321 = vld [vmem:[%s281 + $0x88] sm:$0xff]
        %v322 = vld [vmem:[%s281 + $0x90] sm:$0xff]
        %v323 = vld [vmem:[%s281 + $0x98] sm:$0xff]
        %v324 = vld [vmem:[%s281 + $0xa0] sm:$0xff]
        %v325 = vld [vmem:[%s281 + $0xa8] sm:$0xff]
        %v326 = vld [vmem:[%s281 + $0xb0] sm:$0xff]
        %v327 = vld [vmem:[%s281 + $0xb8] sm:$0xff]
        %v328 = vld [vmem:[%s281 + $0xc0] sm:$0xff]
        %v329 = vld [vmem:[%s281 + $0xc8] sm:$0xff]
        %v330 = vld [vmem:[%s281 + $0xd0] sm:$0xff]
        %v331 = vld [vmem:[%s281 + $0xd8] sm:$0xff]
        %v332 = vld [vmem:[%s281 + $0xe0] sm:$0xff]
        %v333 = vld [vmem:[%s281 + $0xe8] sm:$0xff]
        %v334 = vld [vmem:[%s281 + $0xf0] sm:$0xff]
        %v335 = vld [vmem:[%s281 + $0xf8] sm:$0xff]
        %336 = vmatprep.subr.mxu0 0.0
        %337 = vmatpush1.msra.mxu0 %v304
        %338 = vmatprep.subr.mxu0 0.0
        %339 = vmatpush1.msra.mxu0 %v305
        %340 = vmatprep.subr.mxu0 0.0
        %341 = vmatpush1.msra.mxu0 %v306
        %342 = vmatprep.subr.mxu0 0.0
        %343 = vmatpush1.msra.mxu0 %v307
        %344 = vmatprep.subr.mxu0 0.0
        %345 = vmatpush1.msra.mxu0 %v308
        %346 = vmatprep.subr.mxu0 0.0
        %347 = vmatpush1.msra.mxu0 %v309
        %348 = vmatprep.subr.mxu0 0.0
        %349 = vmatpush1.msra.mxu0 %v310
        %350 = vmatprep.subr.mxu0 0.0
        %351 = vmatpush1.msra.mxu0 %v311
        %352 = vmatprep.subr.mxu0 0.0
        %353 = vmatpush1.msra.mxu0 %v312
        %354 = vmatprep.subr.mxu0 0.0
        %355 = vmatpush1.msra.mxu0 %v313
        %356 = vmatprep.subr.mxu0 0.0
        %357 = vmatpush1.msra.mxu0 %v314
        %358 = vmatprep.subr.mxu0 0.0
        %359 = vmatpush1.msra.mxu0 %v315
        %360 = vmatprep.subr.mxu0 0.0
        %361 = vmatpush1.msra.mxu0 %v316
        %362 = vmatprep.subr.mxu0 0.0
        %363 = vmatpush1.msra.mxu0 %v317
        %364 = vmatprep.subr.mxu0 0.0
        %365 = vmatpush1.msra.mxu0 %v318
        %366 = vmatprep.subr.mxu0 0.0
        %367 = vmatpush1.msra.mxu0 %v319
        %368 = vmatprep.subr.mxu0 0.0
        %369 = vmatpush1.msra.mxu0 %v320
        %370 = vmatprep.subr.mxu0 0.0
        %371 = vmatpush1.msra.mxu0 %v321
        %372 = vmatprep.subr.mxu0 0.0
        %373 = vmatpush1.msra.mxu0 %v322
        %374 = vmatprep.subr.mxu0 0.0
        %375 = vmatpush1.msra.mxu0 %v323
        %376 = vmatprep.subr.mxu0 0.0
        %377 = vmatpush1.msra.mxu0 %v324
        %378 = vmatprep.subr.mxu0 0.0
        %379 = vmatpush1.msra.mxu0 %v325
        %380 = vmatprep.subr.mxu0 0.0
        %381 = vmatpush1.msra.mxu0 %v326
        %382 = vmatprep.subr.mxu0 0.0
        %383 = vmatpush1.msra.mxu0 %v327
        %384 = vmatprep.subr.mxu0 0.0
        %385 = vmatpush1.msra.mxu0 %v328
        %386 = vmatprep.subr.mxu0 0.0
        %387 = vmatpush1.msra.mxu0 %v329
        %388 = vmatprep.subr.mxu0 0.0
        %389 = vmatpush1.msra.mxu0 %v330
        %390 = vmatprep.subr.mxu0 0.0
        %391 = vmatpush1.msra.mxu0 %v331
        %392 = vmatprep.subr.mxu0 0.0
        %393 = vmatpush1.msra.mxu0 %v332
        %394 = vmatprep.subr.mxu0 0.0
        %395 = vmatpush1.msra.mxu0 %v333
        %396 = vmatprep.subr.mxu0 0.0
        %397 = vmatpush1.msra.mxu0 %v334
        %398 = vmatprep.subr.mxu0 0.0
        %399 = vmatpush1.msra.mxu0 %v335
        %400 = vmatprep.mubr.f32.mxu0 %v301
        %401 = vmatmul.mubr.f32.gmra.mrb[0].mxu0 %v300
        %v402 = vpop.f32.mrb[0].mxu0
        %v403 = vadd.f32 0.0, %v402
        %v404 = vpop.f32.mrb[0].mxu0
        %405 = vmatprep.mubr.f32.mxu0 %v303
        %406 = vmatmul.mubr.f32.gmra.mrb[0].mxu0 %v302
        %v407 = vpop.f32.mrb[0].mxu0
        %v408 = vadd.f32 0.0, %v407
        %v409 = vpop.f32.mrb[0].mxu0
        %410 = vdwg.mxu0
        %411 = vst [vmem:[%s299] sm:$0xff] %v403
        %412 = vst [vmem:[%s299 + $0x8] sm:$0xff] %v408
        %s413 = sand.u32 %s71, 1
        %s414 = scalar_lea.sflag [#allocation4], %s413
        %s415 = sand.u32 %s71, 1
        %s416 = smul.addr %s415, 16
        %s417 = scalar_lea.vmem [#allocation3], %s416
        // Predicated region
        $region67: #{_labeled_matching_device.2} parent=61 // pred_check
          %p418 = pneg %p81
        $region68: #{_labeled_matching_device.2} parent=61 // pred_check_branch
          %420 = sbr.rel (%p418) target = $region70
        $region69: #{_labeled_matching_device.2} parent=61 // pred_region
          %s422 = ssub.s32 256, 256
          %423 = vsyncadd %s414, %s422
          %s424 = smul.addr %s16, 128
          %s425 = scalar_lea.hbm %s2, %s424
          %s426 = sshll.u32 %s417, 4
          %s427 = int_to_ptr.vmem [resolvable:$true] %s426
          %432 = dma.vmem_to_hbm [thread:$0]  %s427, 256, %s425, %s414, 128, 384, 8
        $region70: #{_labeled_matching_device.2} parent=61 // pred_fallthru
          _
      $region62: #{_labeled_matching_device.2} parent=5 // pred_fallthru
        _
      %p433 = scmp.le.s32.totalorder 2, %s11
      // Predicated region
      $region71: #{_labeled_matching_device.2} parent=5 // pred_check
        %p434 = pneg %p433
      $region72: #{_labeled_matching_device.2} parent=5 // pred_check_branch
        %436 = sbr.rel (%p434) target = $region74
      $region73: #{_labeled_matching_device.2} parent=5 // pred_region
        %s437 = ssub.s32 %s11, 2
        // Predicated region
        $region75: #{_labeled_matching_device.2} parent=73 // pred_check
          %p438 = pneg %p87
        $region76: #{_labeled_matching_device.2} parent=73 // pred_check_branch
          %440 = sbr.rel (%p438) target = $region78
        $region77: #{_labeled_matching_device.2} parent=73 // pred_region
          %s441 = sand.u32 %s72, 1
          %s442 = scalar_lea.sflag [#allocation4], %s441
          %s443 = sand.u32 %s72, 1
          %s444 = smul.addr %s443, 16
          %s445 = scalar_lea.vmem [#allocation3], %s444
          %446 = dma.done %s442, 256
        $region78: #{_labeled_matching_device.2} parent=73 // pred_fallthru
          _
      $region74: #{_labeled_matching_device.2} parent=5 // pred_fallthru
        _
    $region6: #{_labeled_matching_device.2} parent=1 // loop_footer
      %s15 = sadd.s32 1, %s11
    $region7: #{_labeled_matching_device.2} parent=1 // loop_footer_branch
      %10 = sbr.rel target = $region3
    $region8: #{_labeled_matching_device.2} parent=1 // loop_exit
      _
    %447 = vsyncpa [#allocation4], 1
    %s448 = scalar_lea.sflag [#allocation4], 1
    %449 = vsyncpa %s448, 1

// kernel: _labeled_matching_device.3
$region0: #{_labeled_matching_device.3}
  #allocation0 [shape = 'u32[]', space=smem, size = 0x4, offset = 0x4, fixed_abs, tag = 'smem constant byte address 0x4 - core index']
  #allocation1 [shape = 'u32[144,128]{1,0:T(1,128)}', space=vmem, size = 0x12000, scoped, tag = 'internal scratch']
  #allocation2 [shape = 's32[1]{0}', space=sflag, size = 0x4, scoped, tag = 'scoped memory for _labeled_matching_device.3']
  #allocation3 [shape = 'u8[512]{0}', space=smem, size = 0x200, scoped, tag = 'prefetched SMEM operand 0']
  %s0 = inlined_call_operand.vmem [shape: s32[16], index: 0, kind: input, shape index: {}]
  %s1 = inlined_call_operand.vmem [shape: f32[300,1,256], index: 1, kind: input, shape index: {}]
  %s2 = inlined_call_operand.vmem [shape: f32[16,1,256], index: 2, kind: output, shape index: {}]
  %s3 = sld [smem:[#allocation0]]
  $region37: #{_labeled_matching_device.3} parent=0
    _
  %s5 = ssub.s32 1, %s3
  %s6 = scalar_select 0, %s5, %s3
  %s7 = sshll.u32 %s0, 4
  %s8 = int_to_ptr.vmem [resolvable:$true] %s7
  %10 = dma.vmem_to_smem %s8, 16, [#allocation3], [#allocation2]
  %11 = dma.done [#allocation2], 16
  %12 = sfence
  loop: start=0, step=1, limit=18
  $region2: #{_labeled_matching_device.3} parent=0 // loop_pre_header
    _
  $region3: #{_labeled_matching_device.3} parent=0 // loop_header
    %s14 = sphi 0, %s18
    %p15 = scmp.ge.s32.totalorder %s14, 18
    %s26 = sphi 0, %s28
    %s29 = sphi 0, %s26
    %s30 = sphi 0, %s29
    %s46 = sphi 0, %s30
    %s52 = sphi 0, %s54
    %s55 = sphi 0, %s52
    %s56 = sphi 0, %s55
    %s72 = sphi 0, %s56
  $region4: #{_labeled_matching_device.3} parent=0 // loop_header_branch
    %17 = sbr.rel (%p15) target = $region8
  $region5: #{_labeled_matching_device.3} parent=0 // loop_body
    %s19 = ssub.s32 %s14, 1
    %s20 = ssub.s32 %s14, 2
    %s21 = sadd.s32 %s14, 1
    %s22 = sld [smem:[#allocation3 + %s14]]
    %s23 = sld [smem:[#allocation3 + %s21]]
    %s24 = ssub.s32 %s22, %s23
    %p25 = scmp.eq.s32.totalorder %s24, 0
    %s27 = sadd.s32 %s26, 1
    %s28 = scalar_select %p25, %s26, %s27
    %p31 = pneg %p25
    %p32 = scmp.eq.s32.totalorder %s14, 15
    %p33 = por %p31, %p32
    %p34 = scmp.ne.s32.totalorder %s26, %s29
    %p35 = scmp.eq.s32.totalorder %s14, 0
    %p36 = por %p34, %p35
    %p37 = scmp.ne.s32.totalorder %s26, %s29
    %p38 = scmp.eq.s32.totalorder %s19, 15
    %p39 = por %p37, %p38
    %p40 = scmp.ne.s32.totalorder %s29, %s30
    %p41 = scmp.eq.s32.totalorder %s19, 0
    %p42 = por %p40, %p41
    %p43 = scmp.ne.s32.totalorder %s29, %s30
    %p44 = scmp.eq.s32.totalorder %s20, 15
    %p45 = por %p43, %p44
    %p47 = scmp.ne.s32.totalorder %s30, %s46
    %p48 = scmp.eq.s32.totalorder %s20, 0
    %p49 = por %p47, %p48
    %s50 = ssub.s32 %s14, %s21
    %p51 = scmp.eq.s32.totalorder %s50, 0
    %s53 = sadd.s32 %s52, 1
    %s54 = scalar_select %p51, %s52, %s53
    %p57 = pneg %p51
    %p58 = scmp.eq.s32.totalorder %s14, 15
    %p59 = por %p57, %p58
    %p60 = scmp.ne.s32.totalorder %s52, %s55
    %p61 = scmp.eq.s32.totalorder %s14, 0
    %p62 = por %p60, %p61
    %p63 = scmp.ne.s32.totalorder %s52, %s55
    %p64 = scmp.eq.s32.totalorder %s19, 15
    %p65 = por %p63, %p64
    %p66 = scmp.ne.s32.totalorder %s55, %s56
    %p67 = scmp.eq.s32.totalorder %s19, 0
    %p68 = por %p66, %p67
    %p69 = scmp.ne.s32.totalorder %s55, %s56
    %p70 = scmp.eq.s32.totalorder %s20, 15
    %p71 = por %p69, %p70
    %p73 = scmp.ne.s32.totalorder %s56, %s72
    %p74 = scmp.eq.s32.totalorder %s20, 0
    %p75 = por %p73, %p74
    %p76 = scmp.le.s32.totalorder 1, %s14
    %p77 = scmp.lt.s32.totalorder %s14, 17
    %p78 = pnand %p76, %p77
    %p79 = pneg %p78
    // Predicated region
    $region9: #{_labeled_matching_device.3} parent=5 // pred_check
      _
    $region10: #{_labeled_matching_device.3} parent=5 // pred_check_branch
      %81 = sbr.rel (%p78) target = $region12
    $region11: #{_labeled_matching_device.3} parent=5 // pred_region
      %s82 = ssub.s32 %s14, 1
    $region12: #{_labeled_matching_device.3} parent=5 // pred_fallthru
      _
    %p83 = scmp.lt.s32.totalorder %s14, 16
    // Predicated region
    $region13: #{_labeled_matching_device.3} parent=5 // pred_check
      %p84 = pneg %p83
    $region14: #{_labeled_matching_device.3} parent=5 // pred_check_branch
      %86 = sbr.rel (%p84) target = $region16
    $region15: #{_labeled_matching_device.3} parent=5 // pred_region
      // Predicated region
      $region17: #{_labeled_matching_device.3} parent=15 // pred_check
        %p87 = pneg %p36
      $region18: #{_labeled_matching_device.3} parent=15 // pred_check_branch
        %89 = sbr.rel (%p87) target = $region20
      $region19: #{_labeled_matching_device.3} parent=15 // pred_region
        %s90 = sld [smem:[#allocation3 + %s14]]
        %p91 = scmp.lt.s32.totalorder %s90, 299
        %s92 = scalar_select %p91, %s90, 299
        %s93 = smul.addr %s92, 2
        %s94 = scalar_lea.vmem %s1, %s93
        %s95 = sld [smem:[#allocation3 + %s14]]
      $region20: #{_labeled_matching_device.3} parent=15 // pred_fallthru
        _
    $region16: #{_labeled_matching_device.3} parent=5 // pred_fallthru
      _
    %p96 = scmp.le.s32.totalorder 1, %s14
    %p97 = scmp.lt.s32.totalorder %s14, 17
    %p98 = pnand %p96, %p97
    %p99 = pneg %p98
    // Predicated region
    $region21: #{_labeled_matching_device.3} parent=5 // pred_check
      _
    $region22: #{_labeled_matching_device.3} parent=5 // pred_check_branch
      %101 = sbr.rel (%p98) target = $region24
    $region23: #{_labeled_matching_device.3} parent=5 // pred_region
      %s102 = ssub.s32 %s14, 1
      %s103 = sld [smem:[#allocation3 + %s19]]
      %p104 = scmp.lt.s32.totalorder %s103, 299
      %s105 = scalar_select %p104, %s103, 299
      %s106 = smul.addr %s105, 2
      %s107 = scalar_lea.vmem %s1, %s106
      %p108 = pneg %p42
      %p109 = pneg %p39
      %p110 = pneg %p68
      %p111 = pneg %p65
      %p112 = scmp.lt.s32.totalorder %s19, 15
      %s113 = scalar_select %p112, %s19, 15
      %s114 = smul.addr %s113, 2
      %s115 = scalar_lea.vmem %s2, %s114
      %s116 = sld [smem:[#allocation3 + %s19]]
      %p117 = scmp.lt.s32.totalorder %s116, 299
      %s118 = scalar_select %p117, %s116, 299
      %s119 = smul.addr %s118, 2
      %s120 = scalar_lea.vmem %s1, %s119
      %s121 = sld [smem:[#allocation3 + %s19]]
      %p122 = scmp.lt.s32.totalorder %s19, 15
      %s123 = scalar_select %p122, %s19, 15
      %s124 = smul.addr %s123, 2
      %s125 = scalar_lea.vmem %s2, %s124
      %v126 = vld [vmem:[%s120] sm:$0x3]
      %v127 = vlaneseq
      %vm128 = vcmp.ge.s32.totalorder %v127, 0
      %vm129 = vcmp.lt.s32.totalorder %v127, 256
      %vm130 = vmand %vm128, %vm129
      %131 = vst.msk [vmem:[%s125] sm:$0x3] %vm130, %v126
      %p132 = scmp.lt.s32.totalorder %s19, 15
      %s133 = scalar_select %p132, %s19, 15
      %s134 = smul.addr %s133, 2
      %s135 = scalar_lea.vmem %s2, %s134
      // Predicated region
      $region25: #{_labeled_matching_device.3} parent=23 // pred_check
        %p136 = pneg %p65
      $region26: #{_labeled_matching_device.3} parent=23 // pred_check_branch
        %138 = sbr.rel (%p136) target = $region28
      $region27: #{_labeled_matching_device.3} parent=23 // pred_region
        _
      $region28: #{_labeled_matching_device.3} parent=23 // pred_fallthru
        _
    $region24: #{_labeled_matching_device.3} parent=5 // pred_fallthru
      _
    %p139 = scmp.le.s32.totalorder 2, %s14
    // Predicated region
    $region29: #{_labeled_matching_device.3} parent=5 // pred_check
      %p140 = pneg %p139
    $region30: #{_labeled_matching_device.3} parent=5 // pred_check_branch
      %142 = sbr.rel (%p140) target = $region32
    $region31: #{_labeled_matching_device.3} parent=5 // pred_region
      %s143 = ssub.s32 %s14, 2
      // Predicated region
      $region33: #{_labeled_matching_device.3} parent=31 // pred_check
        %p144 = pneg %p71
      $region34: #{_labeled_matching_device.3} parent=31 // pred_check_branch
        %146 = sbr.rel (%p144) target = $region36
      $region35: #{_labeled_matching_device.3} parent=31 // pred_region
        %p147 = scmp.lt.s32.totalorder %s20, 15
        %s148 = scalar_select %p147, %s20, 15
        %s149 = smul.addr %s148, 2
        %s150 = scalar_lea.vmem %s2, %s149
      $region36: #{_labeled_matching_device.3} parent=31 // pred_fallthru
        _
    $region32: #{_labeled_matching_device.3} parent=5 // pred_fallthru
      _
  $region6: #{_labeled_matching_device.3} parent=0 // loop_footer
    %s18 = sadd.s32 1, %s14
  $region7: #{_labeled_matching_device.3} parent=0 // loop_footer_branch
    %13 = sbr.rel target = $region3
  $region8: #{_labeled_matching_device.3} parent=0 // loop_exit
    _

</llo_original>
